<compile_context>
chip_gen: v7x
topology: tpu7x:2x2x1
jax: 0.10.0
libtpu: 0.0.40
codegen_flags: <defaults>
</compile_context>

<pallas_src>
import math
import numpy as np
import jax
import jax.numpy as jnp
from jax import lax
from jax.experimental import pallas as pl
from jax.experimental.pallas import tpu as pltpu

# ----- problem sizes (d_model = heads * dk, as the module's .view implies) -----
BATCH = 2
SEQ = 8
D_MODEL = 32
HEADS = 4
DK = 8
EPS = 1e-6

ROWS = BATCH * SEQ            # 16  query rows, ordered (b, s)
KCOLS = BATCH * HEADS * SEQ   # 64  key/value rows, ordered (b, h, s)


def _normlayer(x):
    # NormLayer.forward: (x - mean) / (unbiased std + eps).
    # E[x] / E[x^2] formulation -> the two cross-lane reductions are independent
    # and can overlap on the XLU (perf review). Cancellation is negligible for
    # O(1) activations.
    n = x.shape[-1]
    sx = jnp.sum(x, axis=-1, keepdims=True)
    sxx = jnp.sum(x * x, axis=-1, keepdims=True)
    mean = sx * (1.0 / n)
    var = (sxx - sx * mean) * (1.0 / (n - 1))
    # exact reciprocal: it's only a (ROWS, 1) vector (negligible VALU cost) and
    # keeps the residual stream bit-accurate.
    inv = pl.reciprocal(jnp.sqrt(var) + EPS, approx=False)
    return (x - mean) * inv


def decoder_layer_kernel(x_ref, wqkv_ref, bqkv_ref, wo_ref, bo_ref,
                         wfc_ref, bfc_ref, repl_ref, lanekv_ref, gsum_ref,
                         amask_ref, out_ref):
    f32 = jnp.float32
    x = x_ref[...]                                       # (ROWS, D), f32

    # ---- norm_1 ----
    x1 = _normlayer(x)

    # ---- fused q/k/v projection (1/sqrt(dk) already folded into q cols) ----
    qkv = jnp.dot(x1, wqkv_ref[...], preferred_element_type=f32) + bqkv_ref[...]
    q = qkv[:, :D_MODEL]                                 # (ROWS, D), pre-scaled

    # ---- ONE fused replication matmul for K and V, masked per head ----
    # row (b,h,j) of khv = [k[(b,j),:] | v[(b,j),:]] with only head-h lanes kept.
    khv = jnp.dot(repl_ref[...], qkv[:, D_MODEL:],
                  preferred_element_type=f32) * lanekv_ref[...]    # (KCOLS, 2D)
    khat = khv[:, :D_MODEL]
    vhat = khv[:, D_MODEL:]

    # ---- all-batch / all-head scores in ONE NT matmul (contract last dims) ----
    s = lax.dot_general(q, khat, (((1,), (1,)), ((), ())),
                        preferred_element_type=f32)      # (ROWS, KCOLS)
    s = s + amask_ref[...]                               # additive batch mask (0 / -1e30)

    # segmented (per batch,head) softmax; per-row max shift is valid per group
    # because softmax is shift-invariant within each group.
    m = jnp.max(s, axis=-1, keepdims=True)
    e = jnp.exp(s - m)                                   # cross-batch cols -> exactly 0
    denom = jnp.dot(e, gsum_ref[...], preferred_element_type=f32)  # group sums
    # EUP approx reciprocal (perf review); masked cols have e == 0 so no final
    # select is needed.
    p = e * pl.reciprocal(denom + 1e-30, approx=True)

    # one value matmul produces the concatenated heads directly in (ROWS, D)
    concat = jnp.dot(p, vhat, preferred_element_type=f32)
    attn_out = jnp.dot(concat, wo_ref[...], preferred_element_type=f32) + bo_ref[...]

    # dropout_1 -> identity (eval mode)
    x2 = x + attn_out

    # ---- norm_2 + fc1 residual ----
    x3 = _normlayer(x2)
    x4 = x2 + jnp.dot(x3, wfc_ref[...], preferred_element_type=f32) + bfc_ref[...]

    out_ref[...] = x4


def pack_params(params):
    """Pack per-layer weights ONCE (outside the per-call hot path).

    Folds the 1/sqrt(dk) score scale into the q columns of the packed QKV
    weight/bias, so the kernel never multiplies the (ROWS, KCOLS) score block.
    """
    wq, bq, wk, bk, wv, bv, wo, bo, wfc, bfc = params
    scale = 1.0 / math.sqrt(DK)
    wqkv = jnp.concatenate([wq * scale, wk, wv], axis=1)   # (D, 3D)
    bqkv = jnp.concatenate([bq * scale, bk, bv], axis=1)   # (1, 3D)
    return (wqkv, bqkv, wo, bo, wfc, bfc)


def build_constants():
    """Head-replication / masking constants, built host-side ONCE with numpy."""
    r = np.arange(KCOLS)     # key/value column index, ordered (b, h, j)
    c = np.arange(ROWS)      # query row index, ordered (b, i)
    d = np.arange(D_MODEL)
    # replication matrix: row (b,h,j) of R @ kv picks kv row (b,j)
    repl = ((r[:, None] // (HEADS * SEQ) == c[None, :] // SEQ) &
            (r[:, None] % SEQ == c[None, :] % SEQ)).astype(np.float32)   # (KCOLS, ROWS)
    # lane mask: on row (b,h,j) keep only head-h lanes; tiled for [K | V]
    lane = ((r[:, None] // SEQ) % HEADS == d[None, :] // DK).astype(np.float32)
    lane_kv = np.concatenate([lane, lane], axis=1)                       # (KCOLS, 2D)
    # group-sum matrix: columns of the same (batch, head) group (size SEQ)
    gsum = (r[:, None] // SEQ == r[None, :] // SEQ).astype(np.float32)   # (KCOLS, KCOLS)
    # additive batch mask: query (b,i) may only attend to key cols of batch b
    amask = np.where(c[:, None] // SEQ == r[None, :] // (HEADS * SEQ),
                     0.0, -1e30).astype(np.float32)                      # (ROWS, KCOLS)
    return (jnp.asarray(repl), jnp.asarray(lane_kv),
            jnp.asarray(gsum), jnp.asarray(amask))


@jax.jit
def decoder_layer(x, packed, consts):
    # NOTE: keep the grid-free single-TensorCore design at this size; only add a
    # batch grid with dimension_semantics=("parallel",...) if B*S grows to
    # hundreds of rows (per-step pipeline overhead would otherwise dominate).
    B, S, D = x.shape
    wqkv, bqkv, wo, bo, wfc, bfc = packed
    repl, lane_kv, gsum, amask = consts
    vmem = pl.BlockSpec(memory_space=pltpu.MemorySpace.VMEM)
    cost = pl.CostEstimate(flops=560_000, transcendentals=1_100,
                           bytes_accessed=70_000)
    out2d = pl.pallas_call(
        decoder_layer_kernel,
        out_shape=jax.ShapeDtypeStruct((B * S, D), jnp.float32),
        in_specs=[vmem] * 11,
        out_specs=vmem,
        cost_estimate=cost,
    )(x.reshape(B * S, D), wqkv, bqkv, wo, bo, wfc, bfc,
      repl, lane_kv, gsum, amask)
    return out2d.reshape(B, S, D)


# ---------------- plain-JAX reference (for verification) ----------------
def reference(x, params):
    wq, bq, wk, bk, wv, bv, wo, bo, wfc, bfc = params

    def norm(t):
        m = t.mean(-1, keepdims=True)
        s = jnp.sqrt(((t - m) ** 2).sum(-1, keepdims=True) / (t.shape[-1] - 1))
        return (t - m) / (s + EPS)

    B, S, D = x.shape
    x1 = norm(x)
    q = (x1 @ wq + bq).reshape(B, S, HEADS, DK).transpose(0, 2, 1, 3)
    k = (x1 @ wk + bk).reshape(B, S, HEADS, DK).transpose(0, 2, 1, 3)
    v = (x1 @ wv + bv).reshape(B, S, HEADS, DK).transpose(0, 2, 1, 3)
    s = jnp.einsum('bhqd,bhkd->bhqk', q, k) / math.sqrt(DK)
    p = jax.nn.softmax(s, axis=-1)
    o = jnp.einsum('bhqk,bhkd->bhqd', p, v).transpose(0, 2, 1, 3).reshape(B, S, D)
    attn = o @ wo + bo
    x2 = x + attn
    x3 = norm(x2)
    return x2 + x3 @ wfc + bfc


def init_params(key, d_model):
    # deterministic synthetic init (PyTorch-Linear-like uniform bounds)
    bound = 1.0 / math.sqrt(d_model)
    keys = jax.random.split(key, 10)
    def w(k): return jax.random.uniform(k, (d_model, d_model), jnp.float32, -bound, bound)
    def b(k): return jax.random.uniform(k, (1, d_model), jnp.float32, -bound, bound)
    return (w(keys[0]), b(keys[1]),   # q
            w(keys[2]), b(keys[3]),   # k
            w(keys[4]), b(keys[5]),   # v
            w(keys[6]), b(keys[7]),   # out
            w(keys[8]), b(keys[9]))   # fc1


if __name__ == "__main__":
    key = jax.random.PRNGKey(0)
    k_x, k_p = jax.random.split(key)
    x = jax.random.normal(k_x, (BATCH, SEQ, D_MODEL), jnp.float32)
    params = init_params(k_p, D_MODEL)

    packed = pack_params(params)     # once, outside the per-call hot path
    consts = build_constants()       # once, host-side numpy

    out = decoder_layer(x, packed, consts)
    out = jax.block_until_ready(out)

    ref = reference(x, params)
    # 2e-3 tolerance: the EUP approx reciprocal on the softmax denominator has
    # ~2^-12 relative error; every other change is bit-level.  Structural bugs
    # (masks/norms/layout) would show up as O(0.1+) errors.
    np.testing.assert_allclose(np.asarray(out), np.asarray(ref), rtol=2e-3, atol=2e-3)
    print("KERNEL_OK")
</pallas_src>

<mosaic_0001>
module attributes {stable_mosaic.version = 11 : i64} {
  func.func @decoder_layer_kernel(%arg0: memref<16x32xf32, #tpu.memory_space<vmem>>, %arg1: memref<32x96xf32, #tpu.memory_space<vmem>>, %arg2: memref<1x96xf32, #tpu.memory_space<vmem>>, %arg3: memref<32x32xf32, #tpu.memory_space<vmem>>, %arg4: memref<1x32xf32, #tpu.memory_space<vmem>>, %arg5: memref<32x32xf32, #tpu.memory_space<vmem>>, %arg6: memref<1x32xf32, #tpu.memory_space<vmem>>, %arg7: memref<64x16xf32, #tpu.memory_space<vmem>>, %arg8: memref<64x64xf32, #tpu.memory_space<vmem>>, %arg9: memref<64x64xf32, #tpu.memory_space<vmem>>, %arg10: memref<16x64xf32, #tpu.memory_space<vmem>>, %arg11: memref<16x32xf32, #tpu.memory_space<vmem>>) attributes {dimension_semantics = [], scalar_prefetch = 0 : i64, scratch_operands = 0 : i64, tpu.core_type = #tpu.core_type<tc>} {
    %c0 = arith.constant 0 : index
    %c0_0 = arith.constant 0 : index
    %0 = vector.load %arg0[%c0, %c0_0] : memref<16x32xf32, #tpu.memory_space<vmem>>, vector<16x32xf32>
    %cst = arith.constant dense<0.000000e+00> : vector<16xf32>
    %1 = vector.multi_reduction <add>, %0, %cst [1] : vector<16x32xf32> to vector<16xf32>
    %2 = vector.shape_cast %1 : vector<16xf32> to vector<16x1xf32>
    %3 = arith.mulf %0, %0 : vector<16x32xf32>
    %cst_1 = arith.constant dense<0.000000e+00> : vector<16xf32>
    %4 = vector.multi_reduction <add>, %3, %cst_1 [1] : vector<16x32xf32> to vector<16xf32>
    %5 = vector.shape_cast %4 : vector<16xf32> to vector<16x1xf32>
    %cst_2 = arith.constant 3.125000e-02 : f32
    %6 = vector.broadcast %cst_2 : f32 to vector<16x1xf32>
    %7 = arith.mulf %2, %6 : vector<16x1xf32>
    %8 = arith.mulf %2, %7 : vector<16x1xf32>
    %9 = arith.subf %5, %8 : vector<16x1xf32>
    %cst_3 = arith.constant 0.0322580636 : f32
    %10 = vector.broadcast %cst_3 : f32 to vector<16x1xf32>
    %11 = arith.mulf %9, %10 : vector<16x1xf32>
    %12 = math.sqrt %11 : vector<16x1xf32>
    %cst_4 = arith.constant 9.99999997E-7 : f32
    %13 = vector.broadcast %cst_4 : f32 to vector<16x1xf32>
    %14 = arith.addf %12, %13 : vector<16x1xf32>
    %15 = tpu.reciprocal %14 : vector<16x1xf32> -> vector<16x1xf32>
    %16 = vector.broadcast %7 : vector<16x1xf32> to vector<16x32xf32>
    %17 = arith.subf %0, %16 : vector<16x32xf32>
    %18 = vector.broadcast %15 : vector<16x1xf32> to vector<16x32xf32>
    %19 = arith.mulf %17, %18 : vector<16x32xf32>
    %c0_5 = arith.constant 0 : index
    %c0_6 = arith.constant 0 : index
    %20 = vector.load %arg1[%c0_5, %c0_6] : memref<32x96xf32, #tpu.memory_space<vmem>>, vector<32x96xf32>
    %cst_7 = arith.constant dense<0.000000e+00> : vector<16x96xf32>
    %21 = tpu.matmul %19, %20, %cst_7 {dimension_numbers = #tpu.dot_dimension_numbers<[1], [0], [0], [1], [0, 0, 1, 1], [], []>} : vector<16x32xf32>, vector<32x96xf32>, vector<16x96xf32> -> vector<16x96xf32>
    %c0_8 = arith.constant 0 : index
    %c0_9 = arith.constant 0 : index
    %22 = vector.load %arg2[%c0_8, %c0_9] : memref<1x96xf32, #tpu.memory_space<vmem>>, vector<1x96xf32>
    %23 = vector.broadcast %22 : vector<1x96xf32> to vector<16x96xf32>
    %24 = arith.addf %21, %23 : vector<16x96xf32>
    %25 = vector.extract_strided_slice %24 {offsets = [0, 0], sizes = [16, 32], strides = [1, 1]} : vector<16x96xf32> to vector<16x32xf32>
    %c0_10 = arith.constant 0 : index
    %c0_11 = arith.constant 0 : index
    %26 = vector.load %arg7[%c0_10, %c0_11] : memref<64x16xf32, #tpu.memory_space<vmem>>, vector<64x16xf32>
    %27 = vector.extract_strided_slice %24 {offsets = [0, 32], sizes = [16, 64], strides = [1, 1]} : vector<16x96xf32> to vector<16x64xf32>
    %cst_12 = arith.constant dense<0.000000e+00> : vector<64x64xf32>
    %28 = tpu.matmul %26, %27, %cst_12 {dimension_numbers = #tpu.dot_dimension_numbers<[1], [0], [0], [1], [0, 0, 1, 1], [], []>} : vector<64x16xf32>, vector<16x64xf32>, vector<64x64xf32> -> vector<64x64xf32>
    %c0_13 = arith.constant 0 : index
    %c0_14 = arith.constant 0 : index
    %29 = vector.load %arg8[%c0_13, %c0_14] : memref<64x64xf32, #tpu.memory_space<vmem>>, vector<64x64xf32>
    %30 = arith.mulf %28, %29 : vector<64x64xf32>
    %31 = vector.extract_strided_slice %30 {offsets = [0, 0], sizes = [64, 32], strides = [1, 1]} : vector<64x64xf32> to vector<64x32xf32>
    %32 = vector.extract_strided_slice %30 {offsets = [0, 32], sizes = [64, 32], strides = [1, 1]} : vector<64x64xf32> to vector<64x32xf32>
    %cst_15 = arith.constant dense<0.000000e+00> : vector<16x64xf32>
    %33 = tpu.matmul %25, %31, %cst_15 {dimension_numbers = #tpu.dot_dimension_numbers<[1], [1], [0], [0], [0, 0, 1, 0], [], []>} : vector<16x32xf32>, vector<64x32xf32>, vector<16x64xf32> -> vector<16x64xf32>
    %c0_16 = arith.constant 0 : index
    %c0_17 = arith.constant 0 : index
    %34 = vector.load %arg10[%c0_16, %c0_17] : memref<16x64xf32, #tpu.memory_space<vmem>>, vector<16x64xf32>
    %35 = arith.addf %33, %34 : vector<16x64xf32>
    %cst_18 = arith.constant dense<0xFF800000> : vector<16xf32>
    %36 = vector.multi_reduction <maximumf>, %35, %cst_18 [1] : vector<16x64xf32> to vector<16xf32>
    %37 = vector.shape_cast %36 : vector<16xf32> to vector<16x1xf32>
    %38 = vector.broadcast %37 : vector<16x1xf32> to vector<16x64xf32>
    %39 = arith.subf %35, %38 : vector<16x64xf32>
    %40 = math.exp %39 : vector<16x64xf32>
    %c0_19 = arith.constant 0 : index
    %c0_20 = arith.constant 0 : index
    %41 = vector.load %arg9[%c0_19, %c0_20] : memref<64x64xf32, #tpu.memory_space<vmem>>, vector<64x64xf32>
    %cst_21 = arith.constant dense<0.000000e+00> : vector<16x64xf32>
    %42 = tpu.matmul %40, %41, %cst_21 {dimension_numbers = #tpu.dot_dimension_numbers<[1], [0], [0], [1], [0, 0, 1, 1], [], []>} : vector<16x64xf32>, vector<64x64xf32>, vector<16x64xf32> -> vector<16x64xf32>
    %cst_22 = arith.constant 1.000000e-30 : f32
    %43 = vector.broadcast %cst_22 : f32 to vector<16x64xf32>
    %44 = arith.addf %42, %43 : vector<16x64xf32>
    %45 = tpu.reciprocal %44 {approx = true} : vector<16x64xf32> -> vector<16x64xf32>
    %46 = arith.mulf %40, %45 : vector<16x64xf32>
    %cst_23 = arith.constant dense<0.000000e+00> : vector<16x32xf32>
    %47 = tpu.matmul %46, %32, %cst_23 {dimension_numbers = #tpu.dot_dimension_numbers<[1], [0], [0], [1], [0, 0, 1, 1], [], []>} : vector<16x64xf32>, vector<64x32xf32>, vector<16x32xf32> -> vector<16x32xf32>
    %c0_24 = arith.constant 0 : index
    %c0_25 = arith.constant 0 : index
    %48 = vector.load %arg3[%c0_24, %c0_25] : memref<32x32xf32, #tpu.memory_space<vmem>>, vector<32x32xf32>
    %cst_26 = arith.constant dense<0.000000e+00> : vector<16x32xf32>
    %49 = tpu.matmul %47, %48, %cst_26 {dimension_numbers = #tpu.dot_dimension_numbers<[1], [0], [0], [1], [0, 0, 1, 1], [], []>} : vector<16x32xf32>, vector<32x32xf32>, vector<16x32xf32> -> vector<16x32xf32>
    %c0_27 = arith.constant 0 : index
    %c0_28 = arith.constant 0 : index
    %50 = vector.load %arg4[%c0_27, %c0_28] : memref<1x32xf32, #tpu.memory_space<vmem>>, vector<1x32xf32>
    %51 = vector.broadcast %50 : vector<1x32xf32> to vector<16x32xf32>
    %52 = arith.addf %49, %51 : vector<16x32xf32>
    %53 = arith.addf %0, %52 : vector<16x32xf32>
    %cst_29 = arith.constant dense<0.000000e+00> : vector<16xf32>
    %54 = vector.multi_reduction <add>, %53, %cst_29 [1] : vector<16x32xf32> to vector<16xf32>
    %55 = vector.shape_cast %54 : vector<16xf32> to vector<16x1xf32>
    %56 = arith.mulf %53, %53 : vector<16x32xf32>
    %cst_30 = arith.constant dense<0.000000e+00> : vector<16xf32>
    %57 = vector.multi_reduction <add>, %56, %cst_30 [1] : vector<16x32xf32> to vector<16xf32>
    %58 = vector.shape_cast %57 : vector<16xf32> to vector<16x1xf32>
    %cst_31 = arith.constant 3.125000e-02 : f32
    %59 = vector.broadcast %cst_31 : f32 to vector<16x1xf32>
    %60 = arith.mulf %55, %59 : vector<16x1xf32>
    %61 = arith.mulf %55, %60 : vector<16x1xf32>
    %62 = arith.subf %58, %61 : vector<16x1xf32>
    %cst_32 = arith.constant 0.0322580636 : f32
    %63 = vector.broadcast %cst_32 : f32 to vector<16x1xf32>
    %64 = arith.mulf %62, %63 : vector<16x1xf32>
    %65 = math.sqrt %64 : vector<16x1xf32>
    %cst_33 = arith.constant 9.99999997E-7 : f32
    %66 = vector.broadcast %cst_33 : f32 to vector<16x1xf32>
    %67 = arith.addf %65, %66 : vector<16x1xf32>
    %68 = tpu.reciprocal %67 : vector<16x1xf32> -> vector<16x1xf32>
    %69 = vector.broadcast %60 : vector<16x1xf32> to vector<16x32xf32>
    %70 = arith.subf %53, %69 : vector<16x32xf32>
    %71 = vector.broadcast %68 : vector<16x1xf32> to vector<16x32xf32>
    %72 = arith.mulf %70, %71 : vector<16x32xf32>
    %c0_34 = arith.constant 0 : index
    %c0_35 = arith.constant 0 : index
    %73 = vector.load %arg5[%c0_34, %c0_35] : memref<32x32xf32, #tpu.memory_space<vmem>>, vector<32x32xf32>
    %cst_36 = arith.constant dense<0.000000e+00> : vector<16x32xf32>
    %74 = tpu.matmul %72, %73, %cst_36 {dimension_numbers = #tpu.dot_dimension_numbers<[1], [0], [0], [1], [0, 0, 1, 1], [], []>} : vector<16x32xf32>, vector<32x32xf32>, vector<16x32xf32> -> vector<16x32xf32>
    %75 = arith.addf %53, %74 : vector<16x32xf32>
    %c0_37 = arith.constant 0 : index
    %c0_38 = arith.constant 0 : index
    %76 = vector.load %arg6[%c0_37, %c0_38] : memref<1x32xf32, #tpu.memory_space<vmem>>, vector<1x32xf32>
    %77 = vector.broadcast %76 : vector<1x32xf32> to vector<16x32xf32>
    %78 = arith.addf %75, %77 : vector<16x32xf32>
    %c0_39 = arith.constant 0 : index
    %c0_40 = arith.constant 0 : index
    %79 = vector.load %arg11[%c0_39, %c0_40] : memref<16x32xf32, #tpu.memory_space<vmem>>, vector<16x32xf32>
    tpu.vector_store %arg11[%c0_39, %c0_40], %78 {strides = array<i32>} : memref<16x32xf32, #tpu.memory_space<vmem>>, vector<16x32xf32>,
    return
  }
}

</mosaic_0001>

<llo_original>
// kernel: decoder_layer.1
$region0: #{decoder_layer.1}
  #allocation0 [shape = 'u32[]', space=smem, size = 0x4, offset = 0x4, fixed_abs, tag = 'smem constant byte address 0x4 - core index']
  #allocation1 [shape = 'u32[144,128]{1,0:T(1,128)}', space=vmem, size = 0x12000, scoped, tag = 'internal scratch']
  %s0 = inlined_call_operand.vmem [shape: f32[16,32], index: 0, kind: input, shape index: {}]
  %s1 = inlined_call_operand.vmem [shape: f32[32,96], index: 1, kind: input, shape index: {}]
  %s2 = inlined_call_operand.vmem [shape: f32[1,96], index: 2, kind: input, shape index: {}]
  %s3 = inlined_call_operand.hbm [shape: f32[32,32], index: 3, kind: input, shape index: {}]
  %s4 = inlined_call_operand.vmem [shape: f32[1,32], index: 4, kind: input, shape index: {}]
  %s5 = inlined_call_operand.hbm [shape: f32[32,32], index: 5, kind: input, shape index: {}]
  %s6 = inlined_call_operand.hbm [shape: f32[1,32], index: 6, kind: input, shape index: {}]
  %s7 = inlined_call_operand.vmem [shape: f32[64,16], index: 7, kind: input, shape index: {}]
  %s8 = inlined_call_operand.vmem [shape: f32[64,64], index: 8, kind: input, shape index: {}]
  %s9 = inlined_call_operand.hbm [shape: f32[64,64], index: 9, kind: input, shape index: {}]
  %s10 = inlined_call_operand.hbm [shape: f32[16,64], index: 10, kind: input, shape index: {}]
  %s11 = inlined_call_operand.hbm [shape: f32[16,32], index: 11, kind: output, shape index: {}]
  %s12 = sld [smem:[#allocation0]]
  $region74: #{decoder_layer.1} parent=0
    _
  %s14 = ssub.s32 1, %s12
  %s15 = scalar_select 0, %s14, %s12
  $region1: #{decoder_layer.1} parent=0
    #allocation2 [shape = 'u8[16384]{0}', space=vmem, size = 0x4000, scoped, tag = 'input window, operand 3, single buffered']
    #allocation3 [shape = 's32[1]{0}', space=sflag, size = 0x4, scoped, tag = 'scoped memory for decoder_layer.1']
    #allocation4 [shape = 's32[1]{0}', space=sflag, size = 0x4, scoped, tag = 'scoped memory for decoder_layer.1']
    #allocation5 [shape = 'u8[16384]{0}', space=vmem, size = 0x4000, scoped, tag = 'input window, operand 5, single buffered']
    #allocation6 [shape = 's32[1]{0}', space=sflag, size = 0x4, scoped, tag = 'scoped memory for decoder_layer.1']
    #allocation7 [shape = 'u8[512]{0}', space=vmem, size = 0x400, scoped, tag = 'input window, operand 6, single buffered']
    #allocation8 [shape = 'u8[32768]{0}', space=vmem, size = 0x8000, scoped, tag = 'input window, operand 9, single buffered']
    #allocation9 [shape = 's32[1]{0}', space=sflag, size = 0x4, scoped, tag = 'scoped memory for decoder_layer.1']
    #allocation10 [shape = 'u8[8192]{0}', space=vmem, size = 0x2000, scoped, tag = 'input window, operand 10, single buffered']
    #allocation11 [shape = 'u8[8192]{0}', space=vmem, size = 0x2000, scoped, tag = 'output window, operand 0, single buffered']
    %16 = vsyncpa [#allocation3], 0
    %17 = vsyncpa [#allocation6], 0
    %18 = vsyncpa [#allocation9], 0
    %19 = vsyncpa [#allocation4], 0
    // Predicated region
    $region2: #{decoder_layer.1} parent=1 // pred_check
      _
    $region3: #{decoder_layer.1} parent=1 // pred_check_branch
      %21 = sbr.rel (0) target = $region5
    $region4: #{decoder_layer.1} parent=1 // pred_region
      _
    $region5: #{decoder_layer.1} parent=1 // pred_fallthru
      _
    // Predicated region
    $region6: #{decoder_layer.1} parent=1 // pred_check
      _
    $region7: #{decoder_layer.1} parent=1 // pred_check_branch
      %23 = sbr.rel (0) target = $region9
    $region8: #{decoder_layer.1} parent=1 // pred_region
      _
    $region9: #{decoder_layer.1} parent=1 // pred_fallthru
      _
    // Predicated region
    $region10: #{decoder_layer.1} parent=1 // pred_check
      _
    $region11: #{decoder_layer.1} parent=1 // pred_check_branch
      %25 = sbr.rel (0) target = $region13
    $region12: #{decoder_layer.1} parent=1 // pred_region
      _
    $region13: #{decoder_layer.1} parent=1 // pred_fallthru
      _
    // Predicated region
    $region14: #{decoder_layer.1} parent=1 // pred_check
      _
    $region15: #{decoder_layer.1} parent=1 // pred_check_branch
      %27 = sbr.rel (0) target = $region17
    $region16: #{decoder_layer.1} parent=1 // pred_region
      %s29 = ssub.s32 512, 512
      %30 = vsyncadd [#allocation3], %s29
      %s31 = sshll.u32 [#allocation2], 4
      %s32 = int_to_ptr.vmem [resolvable:$true] %s31
      %37 = dma.hbm_to_vmem [thread:$0]  %s3, 512, %s32, [#allocation3], 128, 128, 8
    $region17: #{decoder_layer.1} parent=1 // pred_fallthru
      _
    // Predicated region
    $region18: #{decoder_layer.1} parent=1 // pred_check
      _
    $region19: #{decoder_layer.1} parent=1 // pred_check_branch
      %39 = sbr.rel (0) target = $region21
    $region20: #{decoder_layer.1} parent=1 // pred_region
      _
    $region21: #{decoder_layer.1} parent=1 // pred_fallthru
      _
    // Predicated region
    $region22: #{decoder_layer.1} parent=1 // pred_check
      _
    $region23: #{decoder_layer.1} parent=1 // pred_check_branch
      %41 = sbr.rel (0) target = $region25
    $region24: #{decoder_layer.1} parent=1 // pred_region
      %s43 = ssub.s32 512, 512
      %44 = vsyncadd [#allocation6], %s43
      %s45 = sshll.u32 [#allocation5], 4
      %s46 = int_to_ptr.vmem [resolvable:$true] %s45
      %51 = dma.hbm_to_vmem [thread:$0]  %s5, 512, %s46, [#allocation6], 128, 128, 8
    $region25: #{decoder_layer.1} parent=1 // pred_fallthru
      _
    // Predicated region
    $region26: #{decoder_layer.1} parent=1 // pred_check
      _
    $region27: #{decoder_layer.1} parent=1 // pred_check_branch
      %53 = sbr.rel (0) target = $region29
    $region28: #{decoder_layer.1} parent=1 // pred_region
      %s55 = ssub.s32 16, 16
      %56 = vsyncadd [#allocation6], %s55
      %s58 = sshll.u32 [#allocation7], 4
      %s59 = int_to_ptr.vmem [resolvable:$true] %s58
      %61 = dma.hbm_to_vmem [thread:$0]  %s6, 16, %s59, [#allocation6]
    $region29: #{decoder_layer.1} parent=1 // pred_fallthru
      _
    // Predicated region
    $region30: #{decoder_layer.1} parent=1 // pred_check
      _
    $region31: #{decoder_layer.1} parent=1 // pred_check_branch
      %63 = sbr.rel (0) target = $region33
    $region32: #{decoder_layer.1} parent=1 // pred_region
      _
    $region33: #{decoder_layer.1} parent=1 // pred_fallthru
      _
    // Predicated region
    $region34: #{decoder_layer.1} parent=1 // pred_check
      _
    $region35: #{decoder_layer.1} parent=1 // pred_check_branch
      %65 = sbr.rel (0) target = $region37
    $region36: #{decoder_layer.1} parent=1 // pred_region
      _
    $region37: #{decoder_layer.1} parent=1 // pred_fallthru
      _
    // Predicated region
    $region38: #{decoder_layer.1} parent=1 // pred_check
      _
    $region39: #{decoder_layer.1} parent=1 // pred_check_branch
      %67 = sbr.rel (0) target = $region41
    $region40: #{decoder_layer.1} parent=1 // pred_region
      %s69 = ssub.s32 1024, 1024
      %70 = vsyncadd [#allocation9], %s69
      %s71 = sshll.u32 [#allocation8], 4
      %s72 = int_to_ptr.vmem [resolvable:$true] %s71
      %77 = dma.hbm_to_vmem [thread:$0]  %s9, 1024, %s72, [#allocation9], 128, 128, 8
    $region41: #{decoder_layer.1} parent=1 // pred_fallthru
      _
    // Predicated region
    $region42: #{decoder_layer.1} parent=1 // pred_check
      _
    $region43: #{decoder_layer.1} parent=1 // pred_check_branch
      %79 = sbr.rel (0) target = $region45
    $region44: #{decoder_layer.1} parent=1 // pred_region
      %s81 = ssub.s32 256, 256
      %82 = vsyncadd [#allocation9], %s81
      %s83 = sshll.u32 [#allocation10], 4
      %s84 = int_to_ptr.vmem [resolvable:$true] %s83
      %89 = dma.hbm_to_vmem [thread:$0]  %s10, 256, %s84, [#allocation9], 128, 128, 8
    $region45: #{decoder_layer.1} parent=1 // pred_fallthru
      _
    // Predicated region
    $region46: #{decoder_layer.1} parent=1 // pred_check
      _
    $region47: #{decoder_layer.1} parent=1 // pred_check_branch
      %91 = sbr.rel (0) target = $region49
    $region48: #{decoder_layer.1} parent=1 // pred_region
      %92 = dma.done [#allocation3], 512
    $region49: #{decoder_layer.1} parent=1 // pred_fallthru
      _
    // Predicated region
    $region50: #{decoder_layer.1} parent=1 // pred_check
      _
    $region51: #{decoder_layer.1} parent=1 // pred_check_branch
      %94 = sbr.rel (0) target = $region53
    $region52: #{decoder_layer.1} parent=1 // pred_region
      %95 = dma.done [#allocation6], 512
    $region53: #{decoder_layer.1} parent=1 // pred_fallthru
      _
    // Predicated region
    $region54: #{decoder_layer.1} parent=1 // pred_check
      _
    $region55: #{decoder_layer.1} parent=1 // pred_check_branch
      %97 = sbr.rel (0) target = $region57
    $region56: #{decoder_layer.1} parent=1 // pred_region
      %98 = dma.done [#allocation6], 16
    $region57: #{decoder_layer.1} parent=1 // pred_fallthru
      _
    // Predicated region
    $region58: #{decoder_layer.1} parent=1 // pred_check
      _
    $region59: #{decoder_layer.1} parent=1 // pred_check_branch
      %100 = sbr.rel (0) target = $region61
    $region60: #{decoder_layer.1} parent=1 // pred_region
      %101 = dma.done [#allocation9], 1024
    $region61: #{decoder_layer.1} parent=1 // pred_fallthru
      _
    // Predicated region
    $region62: #{decoder_layer.1} parent=1 // pred_check
      _
    $region63: #{decoder_layer.1} parent=1 // pred_check_branch
      %103 = sbr.rel (0) target = $region65
    $region64: #{decoder_layer.1} parent=1 // pred_region
      %104 = dma.done [#allocation9], 256
    $region65: #{decoder_layer.1} parent=1 // pred_fallthru
      _
    %v105 = vld [vmem:[%s0] sm:$0xff]
    %v106 = vld [vmem:[%s0 + $0x8] sm:$0xff]
    %vm107 = vcmask 261120
    %v108 = vsel %vm107, %v105, 0.0
    %109 = vadd.xlane.f32.xlu0 %v108
    %v110 = vpop.xlane.xlu0 %109
    %v111 = vsel %vm107, %v106, 0.0
    %112 = vadd.xlane.f32.xlu0 %v111
    %v113 = vpop.xlane.xlu0 %112
    %v114 = vmul.f32 %v105, %v105
    %v115 = vmul.f32 %v106, %v106
    %v116 = vsel %vm107, %v114, 0.0
    %117 = vadd.xlane.f32.xlu0 %v116
    %v118 = vpop.xlane.xlu0 %117
    %v119 = vsel %vm107, %v115, 0.0
    %120 = vadd.xlane.f32.xlu0 %v119
    %v121 = vpop.xlane.xlu0 %120
    %v122 = vmul.f32 %v110, 0.03125
    %v123 = vmul.f32 %v113, 0.03125
    %v124 = vmul.f32 %v110, %v122
    %v125 = vmul.f32 %v113, %v123
    %v126 = vsub.f32 %v118, %v124
    %v127 = vsub.f32 %v121, %v125
    %v128 = vmul.f32 %v126, 0.032258064
    %v129 = vmul.f32 %v127, 0.032258064
    %v130 = vrsqrt.pop %v128
    %v131 = vmul.f32 %v128, %v130
    %vm132 = vcmp.eq.f32.partialorder %v128, inf
    %v133 = vsel %vm132, %v128, %v131
    %vm134 = vcmp.eq.f32.partialorder %v128, 0.0
    %v135 = vand.u32 %v128, 2147483648
    %v136 = vsel %vm134, %v135, %v133
    %v137 = vrsqrt.pop %v129
    %v138 = vmul.f32 %v129, %v137
    %vm139 = vcmp.eq.f32.partialorder %v129, inf
    %v140 = vsel %vm139, %v129, %v138
    %vm141 = vcmp.eq.f32.partialorder %v129, 0.0
    %v142 = vand.u32 %v129, 2147483648
    %v143 = vsel %vm141, %v142, %v140
    %v144 = vadd.f32 %v136, 1e-06
    %v145 = vadd.f32 %v143, 1e-06
    %v146 = vrcp.pop %v144
    %v147 = vrcp.pop %v145
    %v148 = vsub.f32 %v105, %v122
    %v149 = vsub.f32 %v106, %v123
    %v150 = vmul.f32 %v148, %v146
    %v151 = vmul.f32 %v149, %v147
    %v152 = vld [vmem:[%s1] sm:$0xff]
    %v153 = vld [vmem:[%s1 + $0x8] sm:$0xff]
    %v154 = vld [vmem:[%s1 + $0x10] sm:$0xff]
    %v155 = vld [vmem:[%s1 + $0x18] sm:$0xff]
    %v156 = vld [vmem:[%s2] sm:$0x1]
    %v158 = vlaneseq
    %v159 = vshrl.u32 %v158, 7
    %v160 = vsub.s32 0, %v159
    %v161 = vrot.slane %v156, %v160
    %v164 = vsel %vm107, %v150, 0
    %v167 = vsel %vm107, %v151, 0
    %169 = vmatprep.subr.mxu0 0.0
    %170 = vmatpush1.msra.mxu0 %v152
    %171 = vmatprep.subr.mxu0 0.0
    %172 = vmatpush1.msra.mxu0 %v153
    %173 = vmatprep.subr.mxu0 0.0
    %174 = vmatpush1.msra.mxu0 %v154
    %175 = vmatprep.subr.mxu0 0.0
    %176 = vmatpush1.msra.mxu0 %v155
    %177 = vmatprep.subr.mxu0 0.0
    %178 = vmatpush1.msra.mxu0 0.0
    %179 = vmatprep.subr.mxu0 0.0
    %180 = vmatpush1.msra.mxu0 0.0
    %181 = vmatprep.subr.mxu0 0.0
    %182 = vmatpush1.msra.mxu0 0.0
    %183 = vmatprep.subr.mxu0 0.0
    %184 = vmatpush1.msra.mxu0 0.0
    %185 = vmatprep.subr.mxu0 0.0
    %186 = vmatpush1.msra.mxu0 0.0
    %187 = vmatprep.subr.mxu0 0.0
    %188 = vmatpush1.msra.mxu0 0.0
    %189 = vmatprep.subr.mxu0 0.0
    %190 = vmatpush1.msra.mxu0 0.0
    %191 = vmatprep.subr.mxu0 0.0
    %192 = vmatpush1.msra.mxu0 0.0
    %193 = vmatprep.subr.mxu0 0.0
    %194 = vmatpush1.msra.mxu0 0.0
    %195 = vmatprep.subr.mxu0 0.0
    %196 = vmatpush1.msra.mxu0 0.0
    %197 = vmatprep.subr.mxu0 0.0
    %198 = vmatpush1.msra.mxu0 0.0
    %199 = vmatprep.subr.mxu0 0.0
    %200 = vmatpush1.msra.mxu0 0.0
    %201 = vmatprep.subr.mxu0 0.0
    %202 = vmatpush1.msra.mxu0 0.0
    %203 = vmatprep.subr.mxu0 0.0
    %204 = vmatpush1.msra.mxu0 0.0
    %205 = vmatprep.subr.mxu0 0.0
    %206 = vmatpush1.msra.mxu0 0.0
    %207 = vmatprep.subr.mxu0 0.0
    %208 = vmatpush1.msra.mxu0 0.0
    %209 = vmatprep.subr.mxu0 0.0
    %210 = vmatpush1.msra.mxu0 0.0
    %211 = vmatprep.subr.mxu0 0.0
    %212 = vmatpush1.msra.mxu0 0.0
    %213 = vmatprep.subr.mxu0 0.0
    %214 = vmatpush1.msra.mxu0 0.0
    %215 = vmatprep.subr.mxu0 0.0
    %216 = vmatpush1.msra.mxu0 0.0
    %217 = vmatprep.subr.mxu0 0.0
    %218 = vmatpush1.msra.mxu0 0.0
    %219 = vmatprep.subr.mxu0 0.0
    %220 = vmatpush1.msra.mxu0 0.0
    %221 = vmatprep.subr.mxu0 0.0
    %222 = vmatpush1.msra.mxu0 0.0
    %223 = vmatprep.subr.mxu0 0.0
    %224 = vmatpush1.msra.mxu0 0.0
    %225 = vmatprep.subr.mxu0 0.0
    %226 = vmatpush1.msra.mxu0 0.0
    %227 = vmatprep.subr.mxu0 0.0
    %228 = vmatpush1.msra.mxu0 0.0
    %229 = vmatprep.subr.mxu0 0.0
    %230 = vmatpush1.msra.mxu0 0.0
    %231 = vmatprep.subr.mxu0 0.0
    %232 = vmatpush1.msra.mxu0 0.0
    %233 = vmatprep.mubr.f32.mxu0 0.0
    %234 = vmatmul.mubr.f32.gmra.mrb[0].mxu0 %v164
    %v235 = vpop.f32.mrb[0].mxu0
    %v236 = vadd.f32 %v161, %v235
    %v237 = vpop.f32.mrb[0].mxu0
    %238 = vmatprep.mubr.f32.mxu0 0.0
    %239 = vmatmul.mubr.f32.gmra.mrb[0].mxu0 %v167
    %v240 = vpop.f32.mrb[0].mxu0
    %v241 = vadd.f32 %v161, %v240
    %v242 = vpop.f32.mrb[0].mxu0
    %243 = vdwg.mxu0
    %v244 = vld [vmem:[%s7] sm:$0xff]
    %v245 = vld [vmem:[%s7 + $0x8] sm:$0xff]
    %v246 = vld [vmem:[%s7 + $0x10] sm:$0xff]
    %v247 = vld [vmem:[%s7 + $0x18] sm:$0xff]
    %v248 = vld [vmem:[%s7 + $0x20] sm:$0xff]
    %v249 = vld [vmem:[%s7 + $0x28] sm:$0xff]
    %v250 = vld [vmem:[%s7 + $0x30] sm:$0xff]
    %v251 = vld [vmem:[%s7 + $0x38] sm:$0xff]
    %254 = vrot.lane.b32.xlu0 %v236, 96
    %v255 = vpop.permute.xlu0 %254
    %256 = vrot.lane.b32.xlu0 %v241, 96
    %v257 = vpop.permute.xlu0 %256
    %vm260 = vcmask 130048
    %v262 = vsel %vm260, %v244, 0
    %v265 = vsel %vm260, %v245, 0
    %v268 = vsel %vm260, %v246, 0
    %v271 = vsel %vm260, %v247, 0
    %v274 = vsel %vm260, %v248, 0
    %v277 = vsel %vm260, %v249, 0
    %v280 = vsel %vm260, %v250, 0
    %v283 = vsel %vm260, %v251, 0
    %285 = vmatprep.subr.mxu0 0.0
    %286 = vmatpush1.msra.mxu0 %v255
    %287 = vmatprep.subr.mxu0 0.0
    %288 = vmatpush1.msra.mxu0 %v257
    %289 = vmatprep.subr.mxu0 0.0
    %290 = vmatpush1.msra.mxu0 0.0
    %291 = vmatprep.subr.mxu0 0.0
    %292 = vmatpush1.msra.mxu0 0.0
    %293 = vmatprep.subr.mxu0 0.0
    %294 = vmatpush1.msra.mxu0 0.0
    %295 = vmatprep.subr.mxu0 0.0
    %296 = vmatpush1.msra.mxu0 0.0
    %297 = vmatprep.subr.mxu0 0.0
    %298 = vmatpush1.msra.mxu0 0.0
    %299 = vmatprep.subr.mxu0 0.0
    %300 = vmatpush1.msra.mxu0 0.0
    %301 = vmatprep.subr.mxu0 0.0
    %302 = vmatpush1.msra.mxu0 0.0
    %303 = vmatprep.subr.mxu0 0.0
    %304 = vmatpush1.msra.mxu0 0.0
    %305 = vmatprep.subr.mxu0 0.0
    %306 = vmatpush1.msra.mxu0 0.0
    %307 = vmatprep.subr.mxu0 0.0
    %308 = vmatpush1.msra.mxu0 0.0
    %309 = vmatprep.subr.mxu0 0.0
    %310 = vmatpush1.msra.mxu0 0.0
    %311 = vmatprep.subr.mxu0 0.0
    %312 = vmatpush1.msra.mxu0 0.0
    %313 = vmatprep.subr.mxu0 0.0
    %314 = vmatpush1.msra.mxu0 0.0
    %315 = vmatprep.subr.mxu0 0.0
    %316 = vmatpush1.msra.mxu0 0.0
    %317 = vmatprep.subr.mxu0 0.0
    %318 = vmatpush1.msra.mxu0 0.0
    %319 = vmatprep.subr.mxu0 0.0
    %320 = vmatpush1.msra.mxu0 0.0
    %321 = vmatprep.subr.mxu0 0.0
    %322 = vmatpush1.msra.mxu0 0.0
    %323 = vmatprep.subr.mxu0 0.0
    %324 = vmatpush1.msra.mxu0 0.0
    %325 = vmatprep.subr.mxu0 0.0
    %326 = vmatpush1.msra.mxu0 0.0
    %327 = vmatprep.subr.mxu0 0.0
    %328 = vmatpush1.msra.mxu0 0.0
    %329 = vmatprep.subr.mxu0 0.0
    %330 = vmatpush1.msra.mxu0 0.0
    %331 = vmatprep.subr.mxu0 0.0
    %332 = vmatpush1.msra.mxu0 0.0
    %333 = vmatprep.subr.mxu0 0.0
    %334 = vmatpush1.msra.mxu0 0.0
    %335 = vmatprep.subr.mxu0 0.0
    %336 = vmatpush1.msra.mxu0 0.0
    %337 = vmatprep.subr.mxu0 0.0
    %338 = vmatpush1.msra.mxu0 0.0
    %339 = vmatprep.subr.mxu0 0.0
    %340 = vmatpush1.msra.mxu0 0.0
    %341 = vmatprep.subr.mxu0 0.0
    %342 = vmatpush1.msra.mxu0 0.0
    %343 = vmatprep.subr.mxu0 0.0
    %344 = vmatpush1.msra.mxu0 0.0
    %345 = vmatprep.subr.mxu0 0.0
    %346 = vmatpush1.msra.mxu0 0.0
    %347 = vmatprep.subr.mxu0 0.0
    %348 = vmatpush1.msra.mxu0 0.0
    %349 = vmatprep.mubr.f32.mxu0 0.0
    %350 = vmatmul.mubr.f32.gmra.mrb[0].mxu0 %v262
    %v351 = vpop.f32.mrb[0].mxu0
    %v352 = vadd.f32 0.0, %v351
    %v353 = vpop.f32.mrb[0].mxu0
    %354 = vmatprep.mubr.f32.mxu0 0.0
    %355 = vmatmul.mubr.f32.gmra.mrb[0].mxu0 %v265
    %v356 = vpop.f32.mrb[0].mxu0
    %v357 = vadd.f32 0.0, %v356
    %v358 = vpop.f32.mrb[0].mxu0
    %359 = vmatprep.mubr.f32.mxu0 0.0
    %360 = vmatmul.mubr.f32.gmra.mrb[0].mxu0 %v268
    %v361 = vpop.f32.mrb[0].mxu0
    %v362 = vadd.f32 0.0, %v361
    %v363 = vpop.f32.mrb[0].mxu0
    %364 = vmatprep.mubr.f32.mxu0 0.0
    %365 = vmatmul.mubr.f32.gmra.mrb[0].mxu0 %v271
    %v366 = vpop.f32.mrb[0].mxu0
    %v367 = vadd.f32 0.0, %v366
    %v368 = vpop.f32.mrb[0].mxu0
    %369 = vmatprep.mubr.f32.mxu0 0.0
    %370 = vmatmul.mubr.f32.gmra.mrb[0].mxu0 %v274
    %v371 = vpop.f32.mrb[0].mxu0
    %v372 = vadd.f32 0.0, %v371
    %v373 = vpop.f32.mrb[0].mxu0
    %374 = vmatprep.mubr.f32.mxu0 0.0
    %375 = vmatmul.mubr.f32.gmra.mrb[0].mxu0 %v277
    %v376 = vpop.f32.mrb[0].mxu0
    %v377 = vadd.f32 0.0, %v376
    %v378 = vpop.f32.mrb[0].mxu0
    %379 = vmatprep.mubr.f32.mxu0 0.0
    %380 = vmatmul.mubr.f32.gmra.mrb[0].mxu0 %v280
    %v381 = vpop.f32.mrb[0].mxu0
    %v382 = vadd.f32 0.0, %v381
    %v383 = vpop.f32.mrb[0].mxu0
    %384 = vmatprep.mubr.f32.mxu0 0.0
    %385 = vmatmul.mubr.f32.gmra.mrb[0].mxu0 %v283
    %v386 = vpop.f32.mrb[0].mxu0
    %v387 = vadd.f32 0.0, %v386
    %v388 = vpop.f32.mrb[0].mxu0
    %389 = vdwg.mxu0
    %v390 = vld [vmem:[%s8] sm:$0xff]
    %v391 = vld [vmem:[%s8 + $0x8] sm:$0xff]
    %v392 = vld [vmem:[%s8 + $0x10] sm:$0xff]
    %v393 = vld [vmem:[%s8 + $0x18] sm:$0xff]
    %v394 = vld [vmem:[%s8 + $0x20] sm:$0xff]
    %v395 = vld [vmem:[%s8 + $0x28] sm:$0xff]
    %v396 = vld [vmem:[%s8 + $0x30] sm:$0xff]
    %v397 = vld [vmem:[%s8 + $0x38] sm:$0xff]
    %v398 = vmul.f32 %v352, %v390
    %v399 = vmul.f32 %v357, %v391
    %v400 = vmul.f32 %v362, %v392
    %v401 = vmul.f32 %v367, %v393
    %v402 = vmul.f32 %v372, %v394
    %v403 = vmul.f32 %v377, %v395
    %v404 = vmul.f32 %v382, %v396
    %v405 = vmul.f32 %v387, %v397
    %v406 = vld [vmem:[#allocation10] sm:$0xff]
    %v407 = vld [vmem:[#allocation10 + $0x8] sm:$0xff]
    %v408 = vsel %vm107, %v236, 0
    %v410 = vsel %vm107, %v241, 0
    %v413 = vsel %vm107, %v398, 0
    %v416 = vsel %vm107, %v399, 0
    %v419 = vsel %vm107, %v400, 0
    %v422 = vsel %vm107, %v401, 0
    %v425 = vsel %vm107, %v402, 0
    %v428 = vsel %vm107, %v403, 0
    %v431 = vsel %vm107, %v404, 0
    %v434 = vsel %vm107, %v405, 0
    %436 = vmatprep.subr.mxu0 0.0
    %437 = vmatpush1.xpose.msra.mxu0 %v413
    %438 = vmatprep.subr.mxu0 0.0
    %439 = vmatpush1.xpose.msra.mxu0 %v416
    %440 = vmatprep.subr.mxu0 0.0
    %441 = vmatpush1.xpose.msra.mxu0 %v419
    %442 = vmatprep.subr.mxu0 0.0
    %443 = vmatpush1.xpose.msra.mxu0 %v422
    %444 = vmatprep.subr.mxu0 0.0
    %445 = vmatpush1.xpose.msra.mxu0 %v425
    %446 = vmatprep.subr.mxu0 0.0
    %447 = vmatpush1.xpose.msra.mxu0 %v428
    %448 = vmatprep.subr.mxu0 0.0
    %449 = vmatpush1.xpose.msra.mxu0 %v431
    %450 = vmatprep.subr.mxu0 0.0
    %451 = vmatpush1.xpose.msra.mxu0 %v434
    %452 = vmatprep.subr.mxu0 0.0
    %453 = vmatpush1.xpose.msra.mxu0 0.0
    %454 = vmatprep.subr.mxu0 0.0
    %455 = vmatpush1.xpose.msra.mxu0 0.0
    %456 = vmatprep.subr.mxu0 0.0
    %457 = vmatpush1.xpose.msra.mxu0 0.0
    %458 = vmatprep.subr.mxu0 0.0
    %459 = vmatpush1.xpose.msra.mxu0 0.0
    %460 = vmatprep.subr.mxu0 0.0
    %461 = vmatpush1.xpose.msra.mxu0 0.0
    %462 = vmatprep.subr.mxu0 0.0
    %463 = vmatpush1.xpose.msra.mxu0 0.0
    %464 = vmatprep.subr.mxu0 0.0
    %465 = vmatpush1.xpose.msra.mxu0 0.0
    %466 = vmatprep.subr.mxu0 0.0
    %467 = vmatpush1.xpose.msra.mxu0 0.0
    %468 = vmatprep.subr.mxu0 0.0
    %469 = vmatpush1.xpose.msra.mxu0 0.0
    %470 = vmatprep.subr.mxu0 0.0
    %471 = vmatpush1.xpose.msra.mxu0 0.0
    %472 = vmatprep.subr.mxu0 0.0
    %473 = vmatpush1.xpose.msra.mxu0 0.0
    %474 = vmatprep.subr.mxu0 0.0
    %475 = vmatpush1.xpose.msra.mxu0 0.0
    %476 = vmatprep.subr.mxu0 0.0
    %477 = vmatpush1.xpose.msra.mxu0 0.0
    %478 = vmatprep.subr.mxu0 0.0
    %479 = vmatpush1.xpose.msra.mxu0 0.0
    %480 = vmatprep.subr.mxu0 0.0
    %481 = vmatpush1.xpose.msra.mxu0 0.0
    %482 = vmatprep.subr.mxu0 0.0
    %483 = vmatpush1.xpose.msra.mxu0 0.0
    %484 = vmatprep.subr.mxu0 0.0
    %485 = vmatpush1.xpose.msra.mxu0 0.0
    %486 = vmatprep.subr.mxu0 0.0
    %487 = vmatpush1.xpose.msra.mxu0 0.0
    %488 = vmatprep.subr.mxu0 0.0
    %489 = vmatpush1.xpose.msra.mxu0 0.0
    %490 = vmatprep.subr.mxu0 0.0
    %491 = vmatpush1.xpose.msra.mxu0 0.0
    %492 = vmatprep.subr.mxu0 0.0
    %493 = vmatpush1.xpose.msra.mxu0 0.0
    %494 = vmatprep.subr.mxu0 0.0
    %495 = vmatpush1.xpose.msra.mxu0 0.0
    %496 = vmatprep.subr.mxu0 0.0
    %497 = vmatpush1.xpose.msra.mxu0 0.0
    %498 = vmatprep.subr.mxu0 0.0
    %499 = vmatpush1.xpose.msra.mxu0 0.0
    %500 = vmatprep.mubr.f32.mxu0 0.0
    %501 = vmatmul.mubr.f32.gmra.mrb[0].mxu0 %v408
    %v502 = vpop.f32.mrb[0].mxu0
    %v503 = vadd.f32 %v406, %v502
    %v504 = vpop.f32.mrb[0].mxu0
    %505 = vmatprep.mubr.f32.mxu0 0.0
    %506 = vmatmul.mubr.f32.gmra.mrb[0].mxu0 %v410
    %v507 = vpop.f32.mrb[0].mxu0
    %v508 = vadd.f32 %v407, %v507
    %v509 = vpop.f32.mrb[0].mxu0
    %510 = vdwg.mxu0
    %vm511 = vcmask 523264
    %v512 = vsel %vm511, %v503, -inf
    %513 = vmax.xlane.f32.xlu0 %v512
    %v514 = vpop.xlane.xlu0 %513
    %v515 = vsel %vm511, %v508, -inf
    %516 = vmax.xlane.f32.xlu0 %v515
    %v517 = vpop.xlane.xlu0 %516
    %v518 = vsub.f32 %v503, %v514
    %v519 = vsub.f32 %v508, %v517
    %v520 = vmul.f32 %v518, 1.442695
    %v521 = vpow.pop %v520
    %v522 = vmul.f32 %v519, 1.442695
    %v523 = vpow.pop %v522
    %v524 = vld [vmem:[#allocation8] sm:$0xff]
    %v525 = vld [vmem:[#allocation8 + $0x8] sm:$0xff]
    %v526 = vld [vmem:[#allocation8 + $0x10] sm:$0xff]
    %v527 = vld [vmem:[#allocation8 + $0x18] sm:$0xff]
    %v528 = vld [vmem:[#allocation8 + $0x20] sm:$0xff]
    %v529 = vld [vmem:[#allocation8 + $0x28] sm:$0xff]
    %v530 = vld [vmem:[#allocation8 + $0x30] sm:$0xff]
    %v531 = vld [vmem:[#allocation8 + $0x38] sm:$0xff]
    %v533 = vsel %vm511, %v521, 0
    %v536 = vsel %vm511, %v523, 0
    %538 = vmatprep.subr.mxu0 0.0
    %539 = vmatpush1.msra.mxu0 %v524
    %540 = vmatprep.subr.mxu0 0.0
    %541 = vmatpush1.msra.mxu0 %v525
    %542 = vmatprep.subr.mxu0 0.0
    %543 = vmatpush1.msra.mxu0 %v526
    %544 = vmatprep.subr.mxu0 0.0
    %545 = vmatpush1.msra.mxu0 %v527
    %546 = vmatprep.subr.mxu0 0.0
    %547 = vmatpush1.msra.mxu0 %v528
    %548 = vmatprep.subr.mxu0 0.0
    %549 = vmatpush1.msra.mxu0 %v529
    %550 = vmatprep.subr.mxu0 0.0
    %551 = vmatpush1.msra.mxu0 %v530
    %552 = vmatprep.subr.mxu0 0.0
    %553 = vmatpush1.msra.mxu0 %v531
    %554 = vmatprep.subr.mxu0 0.0
    %555 = vmatpush1.msra.mxu0 0.0
    %556 = vmatprep.subr.mxu0 0.0
    %557 = vmatpush1.msra.mxu0 0.0
    %558 = vmatprep.subr.mxu0 0.0
    %559 = vmatpush1.msra.mxu0 0.0
    %560 = vmatprep.subr.mxu0 0.0
    %561 = vmatpush1.msra.mxu0 0.0
    %562 = vmatprep.subr.mxu0 0.0
    %563 = vmatpush1.msra.mxu0 0.0
    %564 = vmatprep.subr.mxu0 0.0
    %565 = vmatpush1.msra.mxu0 0.0
    %566 = vmatprep.subr.mxu0 0.0
    %567 = vmatpush1.msra.mxu0 0.0
    %568 = vmatprep.subr.mxu0 0.0
    %569 = vmatpush1.msra.mxu0 0.0
    %570 = vmatprep.subr.mxu0 0.0
    %571 = vmatpush1.msra.mxu0 0.0
    %572 = vmatprep.subr.mxu0 0.0
    %573 = vmatpush1.msra.mxu0 0.0
    %574 = vmatprep.subr.mxu0 0.0
    %575 = vmatpush1.msra.mxu0 0.0
    %576 = vmatprep.subr.mxu0 0.0
    %577 = vmatpush1.msra.mxu0 0.0
    %578 = vmatprep.subr.mxu0 0.0
    %579 = vmatpush1.msra.mxu0 0.0
    %580 = vmatprep.subr.mxu0 0.0
    %581 = vmatpush1.msra.mxu0 0.0
    %582 = vmatprep.subr.mxu0 0.0
    %583 = vmatpush1.msra.mxu0 0.0
    %584 = vmatprep.subr.mxu0 0.0
    %585 = vmatpush1.msra.mxu0 0.0
    %586 = vmatprep.subr.mxu0 0.0
    %587 = vmatpush1.msra.mxu0 0.0
    %588 = vmatprep.subr.mxu0 0.0
    %589 = vmatpush1.msra.mxu0 0.0
    %590 = vmatprep.subr.mxu0 0.0
    %591 = vmatpush1.msra.mxu0 0.0
    %592 = vmatprep.subr.mxu0 0.0
    %593 = vmatpush1.msra.mxu0 0.0
    %594 = vmatprep.subr.mxu0 0.0
    %595 = vmatpush1.msra.mxu0 0.0
    %596 = vmatprep.subr.mxu0 0.0
    %597 = vmatpush1.msra.mxu0 0.0
    %598 = vmatprep.subr.mxu0 0.0
    %599 = vmatpush1.msra.mxu0 0.0
    %600 = vmatprep.subr.mxu0 0.0
    %601 = vmatpush1.msra.mxu0 0.0
    %602 = vmatprep.mubr.f32.mxu0 0.0
    %603 = vmatmul.mubr.f32.gmra.mrb[0].mxu0 %v533
    %v604 = vpop.f32.mrb[0].mxu0
    %v605 = vadd.f32 1e-30, %v604
    %v606 = vpop.f32.mrb[0].mxu0
    %607 = vmatprep.mubr.f32.mxu0 0.0
    %608 = vmatmul.mubr.f32.gmra.mrb[0].mxu0 %v536
    %v609 = vpop.f32.mrb[0].mxu0
    %v610 = vadd.f32 1e-30, %v609
    %v611 = vpop.f32.mrb[0].mxu0
    %612 = vdwg.mxu0
    %v613 = vrcp.pop %v605
    %v614 = vrcp.pop %v610
    %v615 = vmul.f32 %v521, %v613
    %v616 = vmul.f32 %v523, %v614
    %617 = vrot.lane.b32.xlu0 %v398, 96
    %v618 = vpop.permute.xlu0 %617
    %619 = vrot.lane.b32.xlu0 %v399, 96
    %v620 = vpop.permute.xlu0 %619
    %621 = vrot.lane.b32.xlu0 %v400, 96
    %v622 = vpop.permute.xlu0 %621
    %623 = vrot.lane.b32.xlu0 %v401, 96
    %v624 = vpop.permute.xlu0 %623
    %625 = vrot.lane.b32.xlu0 %v402, 96
    %v626 = vpop.permute.xlu0 %625
    %627 = vrot.lane.b32.xlu0 %v403, 96
    %v628 = vpop.permute.xlu0 %627
    %629 = vrot.lane.b32.xlu0 %v404, 96
    %v630 = vpop.permute.xlu0 %629
    %631 = vrot.lane.b32.xlu0 %v405, 96
    %v632 = vpop.permute.xlu0 %631
    %v642 = vsel %vm511, %v615, 0
    %v645 = vsel %vm511, %v616, 0
    %647 = vmatprep.subr.mxu0 0.0
    %648 = vmatpush1.msra.mxu0 %v618
    %649 = vmatprep.subr.mxu0 0.0
    %650 = vmatpush1.msra.mxu0 %v620
    %651 = vmatprep.subr.mxu0 0.0
    %652 = vmatpush1.msra.mxu0 %v622
    %653 = vmatprep.subr.mxu0 0.0
    %654 = vmatpush1.msra.mxu0 %v624
    %655 = vmatprep.subr.mxu0 0.0
    %656 = vmatpush1.msra.mxu0 %v626
    %657 = vmatprep.subr.mxu0 0.0
    %658 = vmatpush1.msra.mxu0 %v628
    %659 = vmatprep.subr.mxu0 0.0
    %660 = vmatpush1.msra.mxu0 %v630
    %661 = vmatprep.subr.mxu0 0.0
    %662 = vmatpush1.msra.mxu0 %v632
    %663 = vmatprep.subr.mxu0 0.0
    %664 = vmatpush1.msra.mxu0 0.0
    %665 = vmatprep.subr.mxu0 0.0
    %666 = vmatpush1.msra.mxu0 0.0
    %667 = vmatprep.subr.mxu0 0.0
    %668 = vmatpush1.msra.mxu0 0.0
    %669 = vmatprep.subr.mxu0 0.0
    %670 = vmatpush1.msra.mxu0 0.0
    %671 = vmatprep.subr.mxu0 0.0
    %672 = vmatpush1.msra.mxu0 0.0
    %673 = vmatprep.subr.mxu0 0.0
    %674 = vmatpush1.msra.mxu0 0.0
    %675 = vmatprep.subr.mxu0 0.0
    %676 = vmatpush1.msra.mxu0 0.0
    %677 = vmatprep.subr.mxu0 0.0
    %678 = vmatpush1.msra.mxu0 0.0
    %679 = vmatprep.subr.mxu0 0.0
    %680 = vmatpush1.msra.mxu0 0.0
    %681 = vmatprep.subr.mxu0 0.0
    %682 = vmatpush1.msra.mxu0 0.0
    %683 = vmatprep.subr.mxu0 0.0
    %684 = vmatpush1.msra.mxu0 0.0
    %685 = vmatprep.subr.mxu0 0.0
    %686 = vmatpush1.msra.mxu0 0.0
    %687 = vmatprep.subr.mxu0 0.0
    %688 = vmatpush1.msra.mxu0 0.0
    %689 = vmatprep.subr.mxu0 0.0
    %690 = vmatpush1.msra.mxu0 0.0
    %691 = vmatprep.subr.mxu0 0.0
    %692 = vmatpush1.msra.mxu0 0.0
    %693 = vmatprep.subr.mxu0 0.0
    %694 = vmatpush1.msra.mxu0 0.0
    %695 = vmatprep.subr.mxu0 0.0
    %696 = vmatpush1.msra.mxu0 0.0
    %697 = vmatprep.subr.mxu0 0.0
    %698 = vmatpush1.msra.mxu0 0.0
    %699 = vmatprep.subr.mxu0 0.0
    %700 = vmatpush1.msra.mxu0 0.0
    %701 = vmatprep.subr.mxu0 0.0
    %702 = vmatpush1.msra.mxu0 0.0
    %703 = vmatprep.subr.mxu0 0.0
    %704 = vmatpush1.msra.mxu0 0.0
    %705 = vmatprep.subr.mxu0 0.0
    %706 = vmatpush1.msra.mxu0 0.0
    %707 = vmatprep.subr.mxu0 0.0
    %708 = vmatpush1.msra.mxu0 0.0
    %709 = vmatprep.subr.mxu0 0.0
    %710 = vmatpush1.msra.mxu0 0.0
    %711 = vmatprep.mubr.f32.mxu0 0.0
    %712 = vmatmul.mubr.f32.gmra.mrb[0].mxu0 %v642
    %v713 = vpop.f32.mrb[0].mxu0
    %v714 = vadd.f32 0.0, %v713
    %v715 = vpop.f32.mrb[0].mxu0
    %716 = vmatprep.mubr.f32.mxu0 0.0
    %717 = vmatmul.mubr.f32.gmra.mrb[0].mxu0 %v645
    %v718 = vpop.f32.mrb[0].mxu0
    %v719 = vadd.f32 0.0, %v718
    %v720 = vpop.f32.mrb[0].mxu0
    %721 = vdwg.mxu0
    %v722 = vld [vmem:[#allocation2] sm:$0xff]
    %v723 = vld [vmem:[#allocation2 + $0x8] sm:$0xff]
    %v724 = vld [vmem:[#allocation2 + $0x10] sm:$0xff]
    %v725 = vld [vmem:[#allocation2 + $0x18] sm:$0xff]
    %v726 = vld [vmem:[%s4] sm:$0x1]
    %v728 = vlaneseq
    %v729 = vshrl.u32 %v728, 7
    %v730 = vsub.s32 0, %v729
    %v731 = vrot.slane %v726, %v730
    %v734 = vsel %vm107, %v714, 0
    %v737 = vsel %vm107, %v719, 0
    %739 = vmatprep.subr.mxu0 0.0
    %740 = vmatpush1.msra.mxu0 %v722
    %741 = vmatprep.subr.mxu0 0.0
    %742 = vmatpush1.msra.mxu0 %v723
    %743 = vmatprep.subr.mxu0 0.0
    %744 = vmatpush1.msra.mxu0 %v724
    %745 = vmatprep.subr.mxu0 0.0
    %746 = vmatpush1.msra.mxu0 %v725
    %747 = vmatprep.subr.mxu0 0.0
    %748 = vmatpush1.msra.mxu0 0.0
    %749 = vmatprep.subr.mxu0 0.0
    %750 = vmatpush1.msra.mxu0 0.0
    %751 = vmatprep.subr.mxu0 0.0
    %752 = vmatpush1.msra.mxu0 0.0
    %753 = vmatprep.subr.mxu0 0.0
    %754 = vmatpush1.msra.mxu0 0.0
    %755 = vmatprep.subr.mxu0 0.0
    %756 = vmatpush1.msra.mxu0 0.0
    %757 = vmatprep.subr.mxu0 0.0
    %758 = vmatpush1.msra.mxu0 0.0
    %759 = vmatprep.subr.mxu0 0.0
    %760 = vmatpush1.msra.mxu0 0.0
    %761 = vmatprep.subr.mxu0 0.0
    %762 = vmatpush1.msra.mxu0 0.0
    %763 = vmatprep.subr.mxu0 0.0
    %764 = vmatpush1.msra.mxu0 0.0
    %765 = vmatprep.subr.mxu0 0.0
    %766 = vmatpush1.msra.mxu0 0.0
    %767 = vmatprep.subr.mxu0 0.0
    %768 = vmatpush1.msra.mxu0 0.0
    %769 = vmatprep.subr.mxu0 0.0
    %770 = vmatpush1.msra.mxu0 0.0
    %771 = vmatprep.subr.mxu0 0.0
    %772 = vmatpush1.msra.mxu0 0.0
    %773 = vmatprep.subr.mxu0 0.0
    %774 = vmatpush1.msra.mxu0 0.0
    %775 = vmatprep.subr.mxu0 0.0
    %776 = vmatpush1.msra.mxu0 0.0
    %777 = vmatprep.subr.mxu0 0.0
    %778 = vmatpush1.msra.mxu0 0.0
    %779 = vmatprep.subr.mxu0 0.0
    %780 = vmatpush1.msra.mxu0 0.0
    %781 = vmatprep.subr.mxu0 0.0
    %782 = vmatpush1.msra.mxu0 0.0
    %783 = vmatprep.subr.mxu0 0.0
    %784 = vmatpush1.msra.mxu0 0.0
    %785 = vmatprep.subr.mxu0 0.0
    %786 = vmatpush1.msra.mxu0 0.0
    %787 = vmatprep.subr.mxu0 0.0
    %788 = vmatpush1.msra.mxu0 0.0
    %789 = vmatprep.subr.mxu0 0.0
    %790 = vmatpush1.msra.mxu0 0.0
    %791 = vmatprep.subr.mxu0 0.0
    %792 = vmatpush1.msra.mxu0 0.0
    %793 = vmatprep.subr.mxu0 0.0
    %794 = vmatpush1.msra.mxu0 0.0
    %795 = vmatprep.subr.mxu0 0.0
    %796 = vmatpush1.msra.mxu0 0.0
    %797 = vmatprep.subr.mxu0 0.0
    %798 = vmatpush1.msra.mxu0 0.0
    %799 = vmatprep.subr.mxu0 0.0
    %800 = vmatpush1.msra.mxu0 0.0
    %801 = vmatprep.subr.mxu0 0.0
    %802 = vmatpush1.msra.mxu0 0.0
    %803 = vmatprep.mubr.f32.mxu0 0.0
    %804 = vmatmul.mubr.f32.gmra.mrb[0].mxu0 %v734
    %v805 = vpop.f32.mrb[0].mxu0
    %v806 = vadd.f32 %v731, %v805
    %v807 = vpop.f32.mrb[0].mxu0
    %808 = vmatprep.mubr.f32.mxu0 0.0
    %809 = vmatmul.mubr.f32.gmra.mrb[0].mxu0 %v737
    %v810 = vpop.f32.mrb[0].mxu0
    %v811 = vadd.f32 %v731, %v810
    %v812 = vpop.f32.mrb[0].mxu0
    %813 = vdwg.mxu0
    %v814 = vadd.f32 %v105, %v806
    %v815 = vadd.f32 %v106, %v811
    %v816 = vsel %vm107, %v814, 0.0
    %817 = vadd.xlane.f32.xlu0 %v816
    %v818 = vpop.xlane.xlu0 %817
    %v819 = vsel %vm107, %v815, 0.0
    %820 = vadd.xlane.f32.xlu0 %v819
    %v821 = vpop.xlane.xlu0 %820
    %v822 = vmul.f32 %v814, %v814
    %v823 = vmul.f32 %v815, %v815
    %v824 = vsel %vm107, %v822, 0.0
    %825 = vadd.xlane.f32.xlu0 %v824
    %v826 = vpop.xlane.xlu0 %825
    %v827 = vsel %vm107, %v823, 0.0
    %828 = vadd.xlane.f32.xlu0 %v827
    %v829 = vpop.xlane.xlu0 %828
    %v830 = vmul.f32 %v818, 0.03125
    %v831 = vmul.f32 %v821, 0.03125
    %v832 = vmul.f32 %v818, %v830
    %v833 = vmul.f32 %v821, %v831
    %v834 = vsub.f32 %v826, %v832
    %v835 = vsub.f32 %v829, %v833
    %v836 = vmul.f32 %v834, 0.032258064
    %v837 = vmul.f32 %v835, 0.032258064
    %v838 = vrsqrt.pop %v836
    %v839 = vmul.f32 %v836, %v838
    %vm840 = vcmp.eq.f32.partialorder %v836, inf
    %v841 = vsel %vm840, %v836, %v839
    %vm842 = vcmp.eq.f32.partialorder %v836, 0.0
    %v843 = vand.u32 %v836, 2147483648
    %v844 = vsel %vm842, %v843, %v841
    %v845 = vrsqrt.pop %v837
    %v846 = vmul.f32 %v837, %v845
    %vm847 = vcmp.eq.f32.partialorder %v837, inf
    %v848 = vsel %vm847, %v837, %v846
    %vm849 = vcmp.eq.f32.partialorder %v837, 0.0
    %v850 = vand.u32 %v837, 2147483648
    %v851 = vsel %vm849, %v850, %v848
    %v852 = vadd.f32 %v844, 1e-06
    %v853 = vadd.f32 %v851, 1e-06
    %v854 = vrcp.pop %v852
    %v855 = vrcp.pop %v853
    %v856 = vsub.f32 %v814, %v830
    %v857 = vsub.f32 %v815, %v831
    %v858 = vmul.f32 %v856, %v854
    %v859 = vmul.f32 %v857, %v855
    %v860 = vld [vmem:[#allocation5] sm:$0xff]
    %v861 = vld [vmem:[#allocation5 + $0x8] sm:$0xff]
    %v862 = vld [vmem:[#allocation5 + $0x10] sm:$0xff]
    %v863 = vld [vmem:[#allocation5 + $0x18] sm:$0xff]
    %v865 = vsel %vm107, %v858, 0
    %v868 = vsel %vm107, %v859, 0
    %870 = vmatprep.subr.mxu0 0.0
    %871 = vmatpush1.msra.mxu0 %v860
    %872 = vmatprep.subr.mxu0 0.0
    %873 = vmatpush1.msra.mxu0 %v861
    %874 = vmatprep.subr.mxu0 0.0
    %875 = vmatpush1.msra.mxu0 %v862
    %876 = vmatprep.subr.mxu0 0.0
    %877 = vmatpush1.msra.mxu0 %v863
    %878 = vmatprep.subr.mxu0 0.0
    %879 = vmatpush1.msra.mxu0 0.0
    %880 = vmatprep.subr.mxu0 0.0
    %881 = vmatpush1.msra.mxu0 0.0
    %882 = vmatprep.subr.mxu0 0.0
    %883 = vmatpush1.msra.mxu0 0.0
    %884 = vmatprep.subr.mxu0 0.0
    %885 = vmatpush1.msra.mxu0 0.0
    %886 = vmatprep.subr.mxu0 0.0
    %887 = vmatpush1.msra.mxu0 0.0
    %888 = vmatprep.subr.mxu0 0.0
    %889 = vmatpush1.msra.mxu0 0.0
    %890 = vmatprep.subr.mxu0 0.0
    %891 = vmatpush1.msra.mxu0 0.0
    %892 = vmatprep.subr.mxu0 0.0
    %893 = vmatpush1.msra.mxu0 0.0
    %894 = vmatprep.subr.mxu0 0.0
    %895 = vmatpush1.msra.mxu0 0.0
    %896 = vmatprep.subr.mxu0 0.0
    %897 = vmatpush1.msra.mxu0 0.0
    %898 = vmatprep.subr.mxu0 0.0
    %899 = vmatpush1.msra.mxu0 0.0
    %900 = vmatprep.subr.mxu0 0.0
    %901 = vmatpush1.msra.mxu0 0.0
    %902 = vmatprep.subr.mxu0 0.0
    %903 = vmatpush1.msra.mxu0 0.0
    %904 = vmatprep.subr.mxu0 0.0
    %905 = vmatpush1.msra.mxu0 0.0
    %906 = vmatprep.subr.mxu0 0.0
    %907 = vmatpush1.msra.mxu0 0.0
    %908 = vmatprep.subr.mxu0 0.0
    %909 = vmatpush1.msra.mxu0 0.0
    %910 = vmatprep.subr.mxu0 0.0
    %911 = vmatpush1.msra.mxu0 0.0
    %912 = vmatprep.subr.mxu0 0.0
    %913 = vmatpush1.msra.mxu0 0.0
    %914 = vmatprep.subr.mxu0 0.0
    %915 = vmatpush1.msra.mxu0 0.0
    %916 = vmatprep.subr.mxu0 0.0
    %917 = vmatpush1.msra.mxu0 0.0
    %918 = vmatprep.subr.mxu0 0.0
    %919 = vmatpush1.msra.mxu0 0.0
    %920 = vmatprep.subr.mxu0 0.0
    %921 = vmatpush1.msra.mxu0 0.0
    %922 = vmatprep.subr.mxu0 0.0
    %923 = vmatpush1.msra.mxu0 0.0
    %924 = vmatprep.subr.mxu0 0.0
    %925 = vmatpush1.msra.mxu0 0.0
    %926 = vmatprep.subr.mxu0 0.0
    %927 = vmatpush1.msra.mxu0 0.0
    %928 = vmatprep.subr.mxu0 0.0
    %929 = vmatpush1.msra.mxu0 0.0
    %930 = vmatprep.subr.mxu0 0.0
    %931 = vmatpush1.msra.mxu0 0.0
    %932 = vmatprep.subr.mxu0 0.0
    %933 = vmatpush1.msra.mxu0 0.0
    %934 = vmatprep.mubr.f32.mxu0 0.0
    %935 = vmatmul.mubr.f32.gmra.mrb[0].mxu0 %v865
    %v936 = vpop.f32.mrb[0].mxu0
    %v937 = vadd.f32 0.0, %v936
    %v938 = vpop.f32.mrb[0].mxu0
    %939 = vmatprep.mubr.f32.mxu0 0.0
    %940 = vmatmul.mubr.f32.gmra.mrb[0].mxu0 %v868
    %v941 = vpop.f32.mrb[0].mxu0
    %v942 = vadd.f32 0.0, %v941
    %v943 = vpop.f32.mrb[0].mxu0
    %944 = vdwg.mxu0
    %v945 = vadd.f32 %v814, %v937
    %v946 = vadd.f32 %v815, %v942
    %v947 = vld [vmem:[#allocation7] sm:$0x1]
    %v949 = vlaneseq
    %v950 = vshrl.u32 %v949, 7
    %v951 = vsub.s32 0, %v950
    %v952 = vrot.slane %v947, %v951
    %v954 = vadd.f32 %v945, %v952
    %v955 = vadd.f32 %v946, %v952
    %956 = vst.msk [vmem:[#allocation11] sm:$0xff] %vm107, %v954
    %957 = vst.msk [vmem:[#allocation11 + $0x8] sm:$0xff] %vm107, %v955
    // Predicated region
    $region66: #{decoder_layer.1} parent=1 // pred_check
      _
    $region67: #{decoder_layer.1} parent=1 // pred_check_branch
      %959 = sbr.rel (0) target = $region69
    $region68: #{decoder_layer.1} parent=1 // pred_region
      %s961 = ssub.s32 256, 256
      %962 = vsyncadd [#allocation4], %s961
      %s963 = sshll.u32 [#allocation11], 4
      %s964 = int_to_ptr.vmem [resolvable:$true] %s963
      %969 = dma.vmem_to_hbm [thread:$0]  %s964, 256, %s11, [#allocation4], 128, 128, 8
    $region69: #{decoder_layer.1} parent=1 // pred_fallthru
      _
    // Predicated region
    $region70: #{decoder_layer.1} parent=1 // pred_check
      _
    $region71: #{decoder_layer.1} parent=1 // pred_check_branch
      %971 = sbr.rel (0) target = $region73
    $region72: #{decoder_layer.1} parent=1 // pred_region
      %972 = dma.done [#allocation4], 256
    $region73: #{decoder_layer.1} parent=1 // pred_fallthru
      _
    %973 = vsyncpa [#allocation3], 1
    %974 = vsyncpa [#allocation6], 1
    %975 = vsyncpa [#allocation9], 1
    %976 = vsyncpa [#allocation4], 1

</llo_original>
